<compile_context>
chip_gen: v5e
topology: v5e:2x2
jax: 0.10.0
libtpu: 0.0.40
codegen_flags: <defaults>
</compile_context>

<pallas_src>
import numpy as np
import jax
import jax.numpy as jnp
from jax.experimental import pallas as pl
from jax.experimental.pallas import tpu as pltpu


def _round_up(x: int, m: int) -> int:
    return ((x + m - 1) // m) * m


def _vmem_capacity_bytes() -> int:
    """Physical VMEM per TensorCore (128 MiB on v5e/v6e, 64 MiB on v7x)."""
    try:
        return int(pltpu.get_tpu_info().vmem_capacity_bytes)
    except Exception:
        return 64 << 20  # conservative fallback (v7x-sized)


def _make_fused_kernel(offsets, c_pad):
    """idx (T, F) int32, table (c_pad, d_total) -> out (T, d_total) f32.

    Builds one combined one-hot via boolean accumulation (single cast) and does
    a single MXU matmul whose result is already the concatenated embedding row.
    """
    num_features = len(offsets)

    def kernel(idx_ref, table_ref, out_ref):
        idx = idx_ref[...]                                          # (T, F) int32
        t = idx.shape[0]
        iota = jax.lax.broadcasted_iota(jnp.int32, (t, c_pad), 1)   # (T, c_pad)

        def shifted(i):
            col = idx[:, i:i + 1]                                   # (T, 1)
            return col if offsets[i] == 0 else col + offsets[i]

        hit = iota == shifted(0)                                    # bool accumulate
        for i in range(1, num_features):                            # static unroll, F small
            hit = hit | (iota == shifted(i))
        onehot = hit.astype(table_ref.dtype)                        # ONE cast

        # NOTE: Mosaic lowers f32 x f32 jnp.dot to its exact MXU path by default
        # (verified below against the f32 gather reference to 1e-6); c_pad is
        # tiny so MXU pass count is not the bottleneck here.
        out_ref[...] = jnp.dot(
            onehot, table_ref[...], preferred_element_type=jnp.float32
        ).astype(out_ref.dtype)

    return kernel


class FeatureEmbedder:
    """JAX/Pallas port of gluonts SCott pts.modules.feature.FeatureEmbedder."""

    def __init__(self, cardinalities, embedding_dims, key,
                 max_tile_n=4096, table_dtype=jnp.float32):
        assert len(cardinalities) == len(embedding_dims)
        self.cardinalities = list(cardinalities)
        self.embedding_dims = list(embedding_dims)
        self.num_features = len(cardinalities)

        keys = jax.random.split(key, self.num_features)
        # nn.Embedding default init: N(0, 1); deterministic via fixed keys.
        self.tables = [
            jax.random.normal(k, (c, d), dtype=jnp.float32)
            for k, c, d in zip(keys, cardinalities, embedding_dims)
        ]

        # Block-diagonal combined table: contraction rows padded to 8 sublanes;
        # columns kept at exactly d_total so the kernel's output block covers the
        # full last dim (only useful bytes are written back to HBM).
        self.d_total = sum(embedding_dims)
        c_total = sum(cardinalities)
        self.c_pad = _round_up(max(c_total, 8), 8)

        combined = np.zeros((self.c_pad, self.d_total), dtype=np.float32)
        offsets, c_off, d_off = [], 0, 0
        for tbl, c, d in zip(self.tables, cardinalities, embedding_dims):
            combined[c_off:c_off + c, d_off:d_off + d] = np.asarray(tbl)
            offsets.append(c_off)
            c_off += c
            d_off += d
        # table_dtype=jnp.bfloat16 halves table VMEM/DMA on v6e/v7x (the one-hot
        # is exact in bf16) but breaks exact f32 parity with PyTorch -> keep f32
        # by default.  The one-hot is accumulated as bool and cast once at the
        # dot, so v5e never does bf16 VPU arithmetic either way.
        self.combined_table = jnp.asarray(combined, dtype=table_dtype)
        self.offsets = tuple(int(o) for o in offsets)
        self._kernel = _make_fused_kernel(self.offsets, self.c_pad)

        # --- VMEM budget (generation-aware: 64 MiB on v7x vs 128 MiB v5e/v6e) ---
        vmem_cap = _vmem_capacity_bytes()
        self._vmem_limit_bytes = min(int(0.75 * vmem_cap), 100 << 20)
        budget = vmem_cap // 2                      # leave headroom for the compiler
        du = _round_up(self.d_total, 128)           # physical lane padding of buffers
        cu = _round_up(self.c_pad, 128)
        fu = _round_up(self.num_features, 128)
        table_bytes = self.c_pad * du * self.combined_table.dtype.itemsize  # 1-buffered
        # double-buffered idx + out tiles, plus ~3x (T, c_pad) one-hot working set
        per_row = 4 * (2 * fu + 2 * du + 3 * cu)
        assert table_bytes < budget, (
            "combined embedding table does not fit in VMEM; the one-hot path "
            "only supports small total cardinality")
        # TODO(synk): for large cardinalities (combined table >> VMEM) switch to a
        # scalar-prefetch row-gather / manual double-buffered DMA path instead of
        # the one-hot @ table matmul.
        tile = (budget - table_bytes) // per_row
        self._tile_cap = max(8, min(int(max_tile_n), (tile // 8) * 8))

    def _choose_tile_n(self, n: int) -> int:
        tile = min(self._tile_cap, _round_up(n, 8))
        # v7x megacore: both TensorCores only engage if the "parallel" grid axis
        # has >= 2 steps; split the rows when there is enough work.
        if n > 8 and pl.cdiv(n, tile) < 2:
            tile = _round_up(pl.cdiv(n, 2), 8)
        return tile

    def __call__(self, features: jax.Array) -> jax.Array:
        lead = features.shape[:-1]
        f = features.shape[-1]
        assert f == self.num_features
        n = int(np.prod(lead)) if lead else 1
        flat = features.reshape(n, f).astype(jnp.int32)
        # TODO(synk): out-of-range / negative indices are not bounds-checked
        # (torch.nn.Embedding raises); they silently select a wrong or zero row.

        tile_n = self._choose_tile_n(n)
        grid = pl.cdiv(n, tile_n)   # partial last block: padded reads, masked writes

        out = pl.pallas_call(
            self._kernel,
            out_shape=jax.ShapeDtypeStruct((n, self.d_total), jnp.float32),
            grid_spec=pltpu.PrefetchScalarGridSpec(
                num_scalar_prefetch=0,
                grid=(grid,),
                in_specs=[
                    pl.BlockSpec((tile_n, f), lambda i: (i, 0)),
                    # Resident table: constant index_map -> fetched once;
                    # single buffer halves its VMEM reservation.
                    pl.BlockSpec((self.c_pad, self.d_total), lambda i: (0, 0),
                                 pipeline_mode=pl.Buffered(1)),
                ],
                out_specs=pl.BlockSpec((tile_n, self.d_total), lambda i: (i, 0)),
            ),
            compiler_params=pltpu.CompilerParams(
                dimension_semantics=("parallel",),        # megacore shard on v7x
                vmem_limit_bytes=self._vmem_limit_bytes,  # explicit (v5e default is 16 MiB)
            ),
        )(flat, self.combined_table)

        # No slice needed: kernel already emitted exactly (n, d_total).
        return out.reshape(*lead, self.d_total)


def _reference(features, tables):
    lead = features.shape[:-1]
    outs = []
    for i, t in enumerate(tables):
        idx = features[..., i].astype(jnp.int32)
        outs.append(jnp.take(t, idx, axis=0))
    return jnp.concatenate(outs, axis=-1).reshape(*lead, -1)


if __name__ == "__main__":
    key = jax.random.PRNGKey(0)
    k_params, k_feat = jax.random.split(key)

    cardinalities = [5, 3, 11]
    embedding_dims = [4, 8, 6]
    batch, seq = 2, 8

    embedder = FeatureEmbedder(cardinalities, embedding_dims, k_params)

    # deterministic integer categorical features, shape (batch, seq, F)
    feat_keys = jax.random.split(k_feat, len(cardinalities))
    feature_cols = [
        jax.random.randint(fk, (batch, seq, 1), 0, c, dtype=jnp.int32)
        for fk, c in zip(feat_keys, cardinalities)
    ]
    features = jnp.concatenate(feature_cols, axis=-1)   # (2, 8, 3)

    out = embedder(features)
    out = jax.block_until_ready(out)

    ref = _reference(features, embedder.tables)
    assert out.shape == (batch, seq, sum(embedding_dims)), out.shape
    np.testing.assert_allclose(np.asarray(out), np.asarray(ref), rtol=1e-6, atol=1e-6)

    print("KERNEL_OK")
</pallas_src>

<mosaic_0001>
module attributes {stable_mosaic.version = 11 : i64} {
  func.func @kernel(%arg0: i32, %arg1: memref<8x3xi32, #tpu.memory_space<vmem>>, %arg2: memref<24x18xf32, #tpu.memory_space<vmem>>, %arg3: memref<8x18xf32, #tpu.memory_space<vmem>>) attributes {dimension_semantics = [#tpu.dimension_semantics<parallel>], iteration_bounds = array<i64: 2>, scalar_prefetch = 0 : i64, scratch_operands = 0 : i64, tpu.core_type = #tpu.core_type<tc>, window_params = [{transform_indices = @transform_0, window_bounds = array<i64: 8, 3>}, {pipeline_mode = #tpu.pipeline_mode<synchronous>, transform_indices = @transform_1, window_bounds = array<i64: 24, 18>}, {transform_indices = @transform_2, window_bounds = array<i64: 8, 18>}]} {
    %c0 = arith.constant 0 : index
    %c0_0 = arith.constant 0 : index
    %0 = vector.load %arg1[%c0, %c0_0] : memref<8x3xi32, #tpu.memory_space<vmem>>, vector<8x3xi32>
    %1 = tpu.iota {dimensions = array<i32: 1>} : vector<8x24xi32>
    %2 = vector.extract_strided_slice %0 {offsets = [0, 0], sizes = [8, 1], strides = [1, 1]} : vector<8x3xi32> to vector<8x1xi32>
    %3 = vector.broadcast %2 : vector<8x1xi32> to vector<8x24xi32>
    %4 = arith.cmpi eq, %1, %3 : vector<8x24xi32>
    %5 = vector.extract_strided_slice %0 {offsets = [0, 1], sizes = [8, 1], strides = [1, 1]} : vector<8x3xi32> to vector<8x1xi32>
    %c5_i32 = arith.constant 5 : i32
    %6 = vector.broadcast %c5_i32 : i32 to vector<8x1xi32>
    %7 = arith.addi %5, %6 : vector<8x1xi32>
    %8 = vector.broadcast %7 : vector<8x1xi32> to vector<8x24xi32>
    %9 = arith.cmpi eq, %1, %8 : vector<8x24xi32>
    %10 = arith.ori %4, %9 : vector<8x24xi1>
    %11 = vector.extract_strided_slice %0 {offsets = [0, 2], sizes = [8, 1], strides = [1, 1]} : vector<8x3xi32> to vector<8x1xi32>
    %c8_i32 = arith.constant 8 : i32
    %12 = vector.broadcast %c8_i32 : i32 to vector<8x1xi32>
    %13 = arith.addi %11, %12 : vector<8x1xi32>
    %14 = vector.broadcast %13 : vector<8x1xi32> to vector<8x24xi32>
    %15 = arith.cmpi eq, %1, %14 : vector<8x24xi32>
    %16 = arith.ori %10, %15 : vector<8x24xi1>
    %17 = arith.extui %16 : vector<8x24xi1> to vector<8x24xi32>
    %18 = arith.sitofp %17 : vector<8x24xi32> to vector<8x24xf32>
    %c0_1 = arith.constant 0 : index
    %c0_2 = arith.constant 0 : index
    %19 = vector.load %arg2[%c0_1, %c0_2] : memref<24x18xf32, #tpu.memory_space<vmem>>, vector<24x18xf32>
    %cst = arith.constant dense<0.000000e+00> : vector<8x18xf32>
    %20 = tpu.matmul %18, %19, %cst {dimension_numbers = #tpu.dot_dimension_numbers<[1], [0], [0], [1], [0, 0, 1, 1], [], []>} : vector<8x24xf32>, vector<24x18xf32>, vector<8x18xf32> -> vector<8x18xf32>
    %c0_3 = arith.constant 0 : index
    %c0_4 = arith.constant 0 : index
    %21 = vector.load %arg3[%c0_3, %c0_4] : memref<8x18xf32, #tpu.memory_space<vmem>>, vector<8x18xf32>
    tpu.vector_store %arg3[%c0_3, %c0_4], %20 {strides = array<i32>} : memref<8x18xf32, #tpu.memory_space<vmem>>, vector<8x18xf32>,
    return
  }
  func.func @transform_0(%arg0: i32) -> (i32, i32) {
    %c0_i32 = arith.constant 0 : i32
    %c0_i32_0 = arith.constant 0 : i32
    return %arg0, %c0_i32 : i32, i32
  }
  func.func @transform_1(%arg0: i32) -> (i32, i32) {
    %c0_i32 = arith.constant 0 : i32
    %c0_i32_0 = arith.constant 0 : i32
    %c0_i32_1 = arith.constant 0 : i32
    return %c0_i32, %c0_i32_0 : i32, i32
  }
  func.func @transform_2(%arg0: i32) -> (i32, i32) {
    %c0_i32 = arith.constant 0 : i32
    %c0_i32_0 = arith.constant 0 : i32
    return %arg0, %c0_i32 : i32, i32
  }
}

</mosaic_0001>

<llo_original>
// kernel: tpu_custom_call.1
$region0: #{tpu_custom_call.1}
  #allocation0 [shape = 'u32[]', space=smem, size = 0x4, offset = 0x4, fixed_abs, tag = 'smem constant byte address 0x4 - core index']
  #allocation1 [shape = 'u32[72,128]{1,0:T(1,128)}', space=vmem, size = 0x9000, scoped, tag = 'internal scratch']
  %s0 = inlined_call_operand.vmem [shape: s32[16,3], index: 0, kind: input, shape index: {}]
  %s1 = inlined_call_operand.hbm [shape: f32[24,18], index: 1, kind: input, shape index: {}]
  %s2 = inlined_call_operand.hbm [shape: f32[16,18], index: 2, kind: output, shape index: {}]
  %s3 = sld [smem:[#allocation0]]
  $region45: #{tpu_custom_call.1} parent=0
    _
  %s5 = ssub.s32 1, %s3
  %s6 = scalar_select 0, %s5, %s3
  $region1: #{tpu_custom_call.1} parent=0
    #allocation2 [shape = 'u8[12288]{0}', space=vmem, size = 0x3000, scoped, tag = 'input window, operand 1, single buffered']
    #allocation3 [shape = 's32[2]{0}', space=sflag, size = 0x8, scoped, tag = 'scoped memory for tpu_custom_call.1']
    #allocation4 [shape = 's32[2]{0}', space=sflag, size = 0x8, scoped, tag = 'scoped memory for tpu_custom_call.1']
    #allocation5 [shape = 'u8[8192]{0}', space=vmem, size = 0x2000, scoped, tag = 'output window, operand 0']
    %7 = vsyncpa [#allocation3], 0
    %8 = vsyncpa [#allocation4], 0
    %s9 = scalar_lea.sflag [#allocation4], 1
    %10 = vsyncpa %s9, 0
    loop: start=0, step=1, limit=4
    $region2: #{tpu_custom_call.1} parent=1 // loop_pre_header
      _
    $region3: #{tpu_custom_call.1} parent=1 // loop_header
      %s12 = sphi 0, %s16
      %p13 = scmp.ge.s32.totalorder %s12, 4
      %s22 = sphi 0, %s24
      %s25 = sphi 0, %s22
      %s26 = sphi 0, %s25
      %s42 = sphi 0, %s26
      %s46 = sphi 0, %s46
      %s48 = sphi 0, %s46
      %s49 = sphi 0, %s48
      %s63 = sphi 0, %s49
      %s69 = sphi 0, %s71
      %s72 = sphi 0, %s69
      %s73 = sphi 0, %s72
      %s89 = sphi 0, %s73
    $region4: #{tpu_custom_call.1} parent=1 // loop_header_branch
      %15 = sbr.rel (%p13) target = $region8
    $region5: #{tpu_custom_call.1} parent=1 // loop_body
      %s17 = ssub.s32 %s12, 1
      %s18 = ssub.s32 %s12, 2
      %s19 = sadd.s32 %s12, 1
      %s20 = ssub.s32 %s12, %s19
      %p21 = scmp.eq.s32.totalorder %s20, 0
      %s23 = sadd.s32 %s22, 1
      %s24 = scalar_select %p21, %s22, %s23
      %p27 = pneg %p21
      %p28 = scmp.eq.s32.totalorder %s12, 1
      %p29 = por %p27, %p28
      %p30 = scmp.ne.s32.totalorder %s22, %s25
      %p31 = scmp.eq.s32.totalorder %s12, 0
      %p32 = por %p30, %p31
      %p33 = scmp.ne.s32.totalorder %s22, %s25
      %p34 = scmp.eq.s32.totalorder %s17, 1
      %p35 = por %p33, %p34
      %p36 = scmp.ne.s32.totalorder %s25, %s26
      %p37 = scmp.eq.s32.totalorder %s17, 0
      %p38 = por %p36, %p37
      %p39 = scmp.ne.s32.totalorder %s25, %s26
      %p40 = scmp.eq.s32.totalorder %s18, 1
      %p41 = por %p39, %p40
      %p43 = scmp.ne.s32.totalorder %s26, %s42
      %p44 = scmp.eq.s32.totalorder %s18, 0
      %p45 = por %p43, %p44
      %s47 = sadd.s32 %s46, 1
      %p50 = scmp.eq.s32.totalorder %s12, 1
      %p51 = scmp.ne.s32.totalorder %s46, %s48
      %p52 = scmp.eq.s32.totalorder %s12, 0
      %p53 = por %p51, %p52
      %p54 = scmp.ne.s32.totalorder %s46, %s48
      %p55 = scmp.eq.s32.totalorder %s17, 1
      %p56 = por %p54, %p55
      %p57 = scmp.ne.s32.totalorder %s48, %s49
      %p58 = scmp.eq.s32.totalorder %s17, 0
      %p59 = por %p57, %p58
      %p60 = scmp.ne.s32.totalorder %s48, %s49
      %p61 = scmp.eq.s32.totalorder %s18, 1
      %p62 = por %p60, %p61
      %p64 = scmp.ne.s32.totalorder %s49, %s63
      %p65 = scmp.eq.s32.totalorder %s18, 0
      %p66 = por %p64, %p65
      %s67 = ssub.s32 %s12, %s19
      %p68 = scmp.eq.s32.totalorder %s67, 0
      %s70 = sadd.s32 %s69, 1
      %s71 = scalar_select %p68, %s69, %s70
      %p74 = pneg %p68
      %p75 = scmp.eq.s32.totalorder %s12, 1
      %p76 = por %p74, %p75
      %p77 = scmp.ne.s32.totalorder %s69, %s72
      %p78 = scmp.eq.s32.totalorder %s12, 0
      %p79 = por %p77, %p78
      %p80 = scmp.ne.s32.totalorder %s69, %s72
      %p81 = scmp.eq.s32.totalorder %s17, 1
      %p82 = por %p80, %p81
      %p83 = scmp.ne.s32.totalorder %s72, %s73
      %p84 = scmp.eq.s32.totalorder %s17, 0
      %p85 = por %p83, %p84
      %p86 = scmp.ne.s32.totalorder %s72, %s73
      %p87 = scmp.eq.s32.totalorder %s18, 1
      %p88 = por %p86, %p87
      %p90 = scmp.ne.s32.totalorder %s73, %s89
      %p91 = scmp.eq.s32.totalorder %s18, 0
      %p92 = por %p90, %p91
      %p93 = scmp.le.s32.totalorder 1, %s12
      %p94 = scmp.lt.s32.totalorder %s12, 3
      %p95 = pnand %p93, %p94
      %p96 = pneg %p95
      // Predicated region
      $region9: #{tpu_custom_call.1} parent=5 // pred_check
        _
      $region10: #{tpu_custom_call.1} parent=5 // pred_check_branch
        %98 = sbr.rel (%p95) target = $region12
      $region11: #{tpu_custom_call.1} parent=5 // pred_region
        %s99 = ssub.s32 %s12, 1
        // Predicated region
        $region13: #{tpu_custom_call.1} parent=11 // pred_check
          %p100 = pneg %p59
        $region14: #{tpu_custom_call.1} parent=11 // pred_check_branch
          %102 = sbr.rel (%p100) target = $region16
        $region15: #{tpu_custom_call.1} parent=11 // pred_region
          %104 = vsyncadd [#allocation3], 0
          %s105 = sshll.u32 %s1, 4
          %s106 = int_to_ptr.hbm [resolvable:$true] %s105
          %s107 = sshll.u32 [#allocation2], 4
          %s108 = int_to_ptr.vmem [resolvable:$true] %s107
          %113 = dma.hbm_to_vmem [thread:$0]  %s106, 384, %s108, [#allocation3], 128, 128, 8
        $region16: #{tpu_custom_call.1} parent=11 // pred_fallthru
          _
      $region12: #{tpu_custom_call.1} parent=5 // pred_fallthru
        _
      %p114 = scmp.lt.s32.totalorder %s12, 2
      // Predicated region
      $region17: #{tpu_custom_call.1} parent=5 // pred_check
        %p115 = pneg %p114
      $region18: #{tpu_custom_call.1} parent=5 // pred_check_branch
        %117 = sbr.rel (%p115) target = $region20
      $region19: #{tpu_custom_call.1} parent=5 // pred_region
        // Predicated region
        $region21: #{tpu_custom_call.1} parent=19 // pred_check
          %p118 = pneg %p32
        $region22: #{tpu_custom_call.1} parent=19 // pred_check_branch
          %120 = sbr.rel (%p118) target = $region24
        $region23: #{tpu_custom_call.1} parent=19 // pred_region
          %p121 = scmp.lt.s32.totalorder %s12, 1
          %s122 = scalar_select %p121, %s12, 1
          %s123 = smul.addr %s122, 8
          %s124 = scalar_lea.vmem %s0, %s123
        $region24: #{tpu_custom_call.1} parent=19 // pred_fallthru
          _
      $region20: #{tpu_custom_call.1} parent=5 // pred_fallthru
        _
      %p125 = scmp.le.s32.totalorder 1, %s12
      %p126 = scmp.lt.s32.totalorder %s12, 3
      %p127 = pnand %p125, %p126
      %p128 = pneg %p127
      // Predicated region
      $region25: #{tpu_custom_call.1} parent=5 // pred_check
        _
      $region26: #{tpu_custom_call.1} parent=5 // pred_check_branch
        %130 = sbr.rel (%p127) target = $region28
      $region27: #{tpu_custom_call.1} parent=5 // pred_region
        %s131 = ssub.s32 %s12, 1
        // Predicated region
        $region29: #{tpu_custom_call.1} parent=27 // pred_check
          %p132 = pneg %p59
        $region30: #{tpu_custom_call.1} parent=27 // pred_check_branch
          %134 = sbr.rel (%p132) target = $region32
        $region31: #{tpu_custom_call.1} parent=27 // pred_region
          %136 = dma.done [#allocation3], 384
        $region32: #{tpu_custom_call.1} parent=27 // pred_fallthru
          _
        %p137 = scmp.lt.s32.totalorder %s17, 1
        %s138 = scalar_select %p137, %s17, 1
        %s139 = smul.addr %s138, 8
        %s140 = scalar_lea.vmem %s0, %s139
        %p141 = pneg %p38
        %p142 = pneg %p35
        %p143 = pneg %p59
        %p144 = pneg %p56
        %p145 = pneg %p85
        %p146 = pneg %p82
        %s147 = sand.u32 %s72, 1
        %s148 = scalar_lea.sflag [#allocation4], %s147
        %s149 = sand.u32 %s72, 1
        %s150 = smul.addr %s149, 8
        %s151 = scalar_lea.vmem [#allocation5], %s150
        %p152 = scmp.lt.s32.totalorder %s17, 1
        %s153 = scalar_select %p152, %s17, 1
        %s154 = smul.addr %s153, 8
        %s155 = scalar_lea.vmem %s0, %s154
        %v156 = vld [vmem:[%s155] sm:$0xff]
        %v157 = vlaneseq
        %v158 = vand.u32 %v157, 127
        %159 = vset.pattern.permute.xlu0 0
        %160 = vperm.xlu0 %159, %v156
        %v161 = vpop.permute.xlu0 %160
        %vm162 = vcmp.eq.s32.totalorder %v158, %v161
        %v163 = vadd.s32 %v156, 5
        %164 = vset.pattern.permute.xlu0 1
        %165 = vperm.xlu0 %164, %v163
        %v166 = vpop.permute.xlu0 %165
        %vm167 = vcmp.eq.s32.totalorder %v158, %v166
        %vm168 = vmor %vm162, %vm167
        %v169 = vadd.s32 %v156, 8
        %170 = vset.pattern.permute.xlu0 2
        %171 = vperm.xlu0 %170, %v169
        %v172 = vpop.permute.xlu0 %171
        %vm173 = vcmp.eq.s32.totalorder %v158, %v172
        %vm174 = vmor %vm168, %vm173
        %v175 = vsel %vm174, 1, 0
        %v176 = vcvt.s32.f32 %v175
        %v177 = vld [vmem:[#allocation2] sm:$0xff]
        %v178 = vld [vmem:[#allocation2 + $0x8] sm:$0xff]
        %v179 = vld [vmem:[#allocation2 + $0x10] sm:$0xff]
        %vm180 = vcmask 195584
        %v182 = vsel %vm180, %v176, 0
        %184 = vmatpush.msra.mxu0 0.0
        %185 = vmatpush.msra.mxu0 0.0
        %186 = vmatpush.msra.mxu0 0.0
        %187 = vmatpush.msra.mxu0 0.0
        %188 = vmatpush.msra.mxu0 0.0
        %189 = vmatpush.msra.mxu0 0.0
        %190 = vmatpush.msra.mxu0 0.0
        %191 = vmatpush.msra.mxu0 0.0
        %192 = vmatpush.msra.mxu0 0.0
        %193 = vmatpush.msra.mxu0 0.0
        %194 = vmatpush.msra.mxu0 0.0
        %195 = vmatpush.msra.mxu0 0.0
        %196 = vmatpush.msra.mxu0 0.0
        %197 = vmatpush.msra.mxu0 %v179
        %198 = vmatpush.msra.mxu0 %v178
        %199 = vmatpush.msra.mxu0 %v177
        %200 = vmatmul.f32.gmra.mxu0 %v182
        %v201 = vpop.f32.mrf.mxu0
        %v202 = vadd.f32 0.0, %v201
        %203 = vdwg.mxu0
        %vm204 = vcmask 146432
        %205 = vst.msk [vmem:[%s151] sm:$0xff] %vm204, %v202
        %s206 = sand.u32 %s72, 1
        %s207 = scalar_lea.sflag [#allocation4], %s206
        %s208 = sand.u32 %s72, 1
        %s209 = smul.addr %s208, 8
        %s210 = scalar_lea.vmem [#allocation5], %s209
        // Predicated region
        $region33: #{tpu_custom_call.1} parent=27 // pred_check
          %p211 = pneg %p82
        $region34: #{tpu_custom_call.1} parent=27 // pred_check_branch
          %213 = sbr.rel (%p211) target = $region36
        $region35: #{tpu_custom_call.1} parent=27 // pred_region
          %215 = vsyncadd %s207, 0
          %s216 = smul.addr %s17, 8
          %s217 = scalar_lea.hbm %s2, %s216
          %s219 = sshll.u32 %s210, 4
          %s220 = int_to_ptr.vmem [resolvable:$true] %s219
          %s221 = sshll.u32 %s217, 4
          %s222 = int_to_ptr.hbm [resolvable:$true] %s221
          %224 = dma.vmem_to_hbm [thread:$0]  %s220, 128, %s222, %s207
        $region36: #{tpu_custom_call.1} parent=27 // pred_fallthru
          _
      $region28: #{tpu_custom_call.1} parent=5 // pred_fallthru
        _
      %p225 = scmp.le.s32.totalorder 2, %s12
      // Predicated region
      $region37: #{tpu_custom_call.1} parent=5 // pred_check
        %p226 = pneg %p225
      $region38: #{tpu_custom_call.1} parent=5 // pred_check_branch
        %228 = sbr.rel (%p226) target = $region40
      $region39: #{tpu_custom_call.1} parent=5 // pred_region
        %s229 = ssub.s32 %s12, 2
        // Predicated region
        $region41: #{tpu_custom_call.1} parent=39 // pred_check
          %p230 = pneg %p88
        $region42: #{tpu_custom_call.1} parent=39 // pred_check_branch
          %232 = sbr.rel (%p230) target = $region44
        $region43: #{tpu_custom_call.1} parent=39 // pred_region
          %s233 = sand.u32 %s73, 1
          %s234 = scalar_lea.sflag [#allocation4], %s233
          %s235 = sand.u32 %s73, 1
          %s236 = smul.addr %s235, 8
          %s237 = scalar_lea.vmem [#allocation5], %s236
          %239 = dma.done %s234, 128
        $region44: #{tpu_custom_call.1} parent=39 // pred_fallthru
          _
      $region40: #{tpu_custom_call.1} parent=5 // pred_fallthru
        _
    $region6: #{tpu_custom_call.1} parent=1 // loop_footer
      %s16 = sadd.s32 1, %s12
    $region7: #{tpu_custom_call.1} parent=1 // loop_footer_branch
      %11 = sbr.rel target = $region3
    $region8: #{tpu_custom_call.1} parent=1 // loop_exit
      _
    %240 = vsyncpa [#allocation3], 1
    %s241 = scalar_lea.sflag [#allocation3], 1
    %242 = vsyncpa %s241, 1
    %243 = vsyncpa [#allocation4], 1
    %s244 = scalar_lea.sflag [#allocation4], 1
    %245 = vsyncpa %s244, 1

</llo_original>
